<compile_context>
chip_gen: v7x
topology: tpu7x:2x2x1
jax: 0.10.0
libtpu: 0.0.40
codegen_flags: <defaults>
</compile_context>

<pallas_src>
import functools

import jax
import jax.numpy as jnp
from jax.experimental import pallas as pl
from jax.experimental.pallas import tpu as pltpu


def _make_kernel(s, g, W, Wout):
    """Kernel over one row block.

    e_ref:      (W, Wout)    factored 0/1 expansion matrix (f32, shared)
    x_ref:      (rb, g*W)    rb flat rows, each holding g input image rows
    out_in_ref: (rb, g*s*Wout) lane-dense flat view of the matching `out` rows
    o_ref:      (rb, g*s*Wout) aliased with out_in_ref's HBM buffer
    """
    def kernel(e_ref, x_ref, out_in_ref, o_ref):
        for r in range(g):
            xr = x_ref[:, pl.ds(r * W, W)].astype(jnp.float32)
            # Exact nearest-neighbour width expansion (each output column picks
            # exactly one x column); HIGHEST keeps the copy bit-exact for f32.
            base = jnp.dot(xr, e_ref[...],
                           precision=jax.lax.Precision.HIGHEST,
                           preferred_element_type=jnp.float32)       # (rb, Wout)
            for j in range(s):
                lo = (r * s + j) * Wout
                cur = out_in_ref[:, pl.ds(lo, Wout)].astype(jnp.float32)
                o_ref[:, pl.ds(lo, Wout)] = (cur + base).astype(o_ref.dtype)
    return kernel


def _round_up(a, b):
    return ((a + b - 1) // b) * b


def _choose_row_block(num_rows, row_bytes, target_bytes=4 << 20):
    """Row block: multiple of 8, sized so one `out` tile is ~target_bytes."""
    rb = max(8, (target_bytes // max(row_bytes, 1)) // 8 * 8)
    return min(rb, _round_up(num_rows, 8))


def model_end_forward(x, out, upscale=4):
    """x: (N, C, H, W); out: (N, C, H*s, W*s). Returns out + nearest_up(x)."""
    N, C, H, W = x.shape
    s = int(upscale)
    Hout, Wout = H * s, W * s
    assert out.shape == (N, C, Hout, Wout), (out.shape, (N, C, Hout, Wout))

    SW = s * Wout                  # out columns produced by one input row (= s*s*W)

    # Lane-density guard: group g consecutive input rows per flat row so the out
    # BlockSpec's last dim is a multiple of 128 (unmasked full-width stores).
    g = 1
    if SW % 128 != 0:
        g = H
        for cand in range(1, H + 1):
            if H % cand == 0 and (cand * SW) % 128 == 0:
                g = cand
                break
    L = g * SW
    R = (N * C * H) // g

    # Free, contiguous reshapes (pure layout plumbing in the wrapper).
    x2 = x.reshape(R, g * W)
    out2 = out.reshape(R, L)

    # Factored exact 0/1 expansion: e[w, m] = 1 iff output column m (within one
    # upsampled row) reads input column w, i.e. m // s == w.  Shape (W, Wout).
    m_ids = jax.lax.broadcasted_iota(jnp.int32, (W, Wout), 1)
    w_ids = jax.lax.broadcasted_iota(jnp.int32, (W, Wout), 0)
    e = (m_ids // s == w_ids).astype(jnp.float32)

    dsize = out.dtype.itemsize
    rb = _choose_row_block(R, L * dsize)
    grid = (pl.cdiv(R, rb),)

    # Explicit VMEM budget: aliased out tile counted twice (read + write), each
    # double-buffered, plus x tile, E', and f32 matmul/add intermediates.
    vmem_need = (4 * rb * L * dsize
                 + 2 * rb * g * W * x.dtype.itemsize
                 + 2 * W * Wout * 4
                 + 3 * rb * Wout * 4)
    vmem_limit = int(min(max(vmem_need + (8 << 20), 32 << 20), 64 << 20))

    cost = pl.CostEstimate(
        flops=2 * N * C * H * W * Wout,
        transcendentals=0,
        bytes_accessed=dsize * 2 * R * L + x.dtype.itemsize * R * g * W,
    )

    kernel = _make_kernel(s, g, W, Wout)

    res = pl.pallas_call(
        kernel,
        out_shape=jax.ShapeDtypeStruct((R, L), out.dtype),
        grid_spec=pltpu.PrefetchScalarGridSpec(
            num_scalar_prefetch=0,
            grid=grid,
            in_specs=[
                pl.BlockSpec((W, Wout), lambda i: (0, 0)),     # shared E'
                pl.BlockSpec((rb, g * W), lambda i: (i, 0)),   # x rows
                pl.BlockSpec((rb, L), lambda i: (i, 0)),       # out rows (read)
            ],
            out_specs=pl.BlockSpec((rb, L), lambda i: (i, 0)),
        ),
        # Reproduce the in-place `out += base`: output aliases the `out` operand.
        input_output_aliases={2: 0},
        compiler_params=pltpu.CompilerParams(
            dimension_semantics=("parallel",),
            vmem_limit_bytes=vmem_limit),
        cost_estimate=cost,
    )(e, x2, out2)

    return res.reshape(N, C, Hout, Wout)


if __name__ == "__main__":
    upscale = 4
    N, C, H, W = 2, 4, 16, 16
    Hout, Wout = H * upscale, W * upscale

    key = jax.random.PRNGKey(0)
    kx, ko = jax.random.split(key)
    x = jax.random.normal(kx, (N, C, H, W), dtype=jnp.float32)
    out = jax.random.normal(ko, (N, C, Hout, Wout), dtype=jnp.float32)

    # Pure-JAX reference of the PyTorch forward (computed BEFORE the call,
    # since `out` is donated to the kernel below).
    base_ref = jnp.repeat(jnp.repeat(x, upscale, axis=2), upscale, axis=3)
    expected = out + base_ref
    jax.block_until_ready(expected)

    # Donate `out` so input_output_aliases is truly in-place (no defensive copy).
    fwd = jax.jit(functools.partial(model_end_forward, upscale=upscale),
                  donate_argnums=(1,))
    result = fwd(x, out)
    jax.block_until_ready(result)

    assert result.shape == expected.shape
    assert jnp.allclose(result, expected, atol=1e-5, rtol=1e-5), "mismatch vs reference"

    print("KERNEL_OK")
</pallas_src>

<mosaic_0001>
module attributes {stable_mosaic.version = 11 : i64} {
  func.func @kernel(%arg0: i32, %arg1: memref<16x64xf32, #tpu.memory_space<vmem>>, %arg2: memref<128x16xf32, #tpu.memory_space<vmem>>, %arg3: memref<128x256xf32, #tpu.memory_space<vmem>>, %arg4: memref<128x256xf32, #tpu.memory_space<vmem>>) attributes {dimension_semantics = [#tpu.dimension_semantics<parallel>], iteration_bounds = array<i64: 1>, scalar_prefetch = 0 : i64, scratch_operands = 0 : i64, tpu.core_type = #tpu.core_type<tc>, window_params = [{pipeline_mode = #tpu.pipeline_mode<synchronous>, transform_indices = @transform_0, window_bounds = array<i64: 16, 64>}, {transform_indices = @transform_1, window_bounds = array<i64: 128, 16>}, {transform_indices = @transform_2, window_bounds = array<i64: 128, 256>}, {transform_indices = @transform_3, window_bounds = array<i64: 128, 256>}]} {
    %c0 = arith.constant 0 : index
    %c0_0 = arith.constant 0 : index
    %0 = vector.load %arg2[%c0, %c0_0] : memref<128x16xf32, #tpu.memory_space<vmem>>, vector<128x16xf32>
    %c0_1 = arith.constant 0 : index
    %c0_2 = arith.constant 0 : index
    %1 = vector.load %arg1[%c0_1, %c0_2] : memref<16x64xf32, #tpu.memory_space<vmem>>, vector<16x64xf32>
    %cst = arith.constant dense<0.000000e+00> : vector<128x64xf32>
    %2 = tpu.matmul %0, %1, %cst {dimension_numbers = #tpu.dot_dimension_numbers<[1], [0], [0], [1], [0, 0, 1, 1], [], []>, precision = #tpu.contract_precision<fp32>} : vector<128x16xf32>, vector<16x64xf32>, vector<128x64xf32> -> vector<128x64xf32>
    %c0_3 = arith.constant 0 : index
    %c0_4 = arith.constant 0 : index
    %3 = vector.load %arg3[%c0_3, %c0_4] : memref<128x256xf32, #tpu.memory_space<vmem>>, vector<128x64xf32>
    %4 = arith.addf %3, %2 : vector<128x64xf32>
    %c0_5 = arith.constant 0 : index
    %c0_6 = arith.constant 0 : index
    %5 = vector.load %arg4[%c0_5, %c0_6] : memref<128x256xf32, #tpu.memory_space<vmem>>, vector<128x64xf32>
    tpu.vector_store %arg4[%c0_5, %c0_6], %4 {strides = array<i32>} : memref<128x256xf32, #tpu.memory_space<vmem>>, vector<128x64xf32>,
    %c0_7 = arith.constant 0 : index
    %c64 = arith.constant 64 : index
    %6 = vector.load %arg3[%c0_7, %c64] : memref<128x256xf32, #tpu.memory_space<vmem>>, vector<128x64xf32>
    %7 = arith.addf %6, %2 : vector<128x64xf32>
    %c0_8 = arith.constant 0 : index
    %c64_9 = arith.constant 64 : index
    %8 = vector.load %arg4[%c0_8, %c64_9] : memref<128x256xf32, #tpu.memory_space<vmem>>, vector<128x64xf32>
    tpu.vector_store %arg4[%c0_8, %c64_9], %7 {strides = array<i32>} : memref<128x256xf32, #tpu.memory_space<vmem>>, vector<128x64xf32>,
    %c0_10 = arith.constant 0 : index
    %c128 = arith.constant 128 : index
    %9 = vector.load %arg3[%c0_10, %c128] : memref<128x256xf32, #tpu.memory_space<vmem>>, vector<128x64xf32>
    %10 = arith.addf %9, %2 : vector<128x64xf32>
    %c0_11 = arith.constant 0 : index
    %c128_12 = arith.constant 128 : index
    %11 = vector.load %arg4[%c0_11, %c128_12] : memref<128x256xf32, #tpu.memory_space<vmem>>, vector<128x64xf32>
    tpu.vector_store %arg4[%c0_11, %c128_12], %10 {strides = array<i32>} : memref<128x256xf32, #tpu.memory_space<vmem>>, vector<128x64xf32>,
    %c0_13 = arith.constant 0 : index
    %c192 = arith.constant 192 : index
    %12 = vector.load %arg3[%c0_13, %c192] : memref<128x256xf32, #tpu.memory_space<vmem>>, vector<128x64xf32>
    %13 = arith.addf %12, %2 : vector<128x64xf32>
    %c0_14 = arith.constant 0 : index
    %c192_15 = arith.constant 192 : index
    %14 = vector.load %arg4[%c0_14, %c192_15] : memref<128x256xf32, #tpu.memory_space<vmem>>, vector<128x64xf32>
    tpu.vector_store %arg4[%c0_14, %c192_15], %13 {strides = array<i32>} : memref<128x256xf32, #tpu.memory_space<vmem>>, vector<128x64xf32>,
    return
  }
  func.func @transform_0(%arg0: i32) -> (i32, i32) {
    %c0_i32 = arith.constant 0 : i32
    %c0_i32_0 = arith.constant 0 : i32
    %c0_i32_1 = arith.constant 0 : i32
    return %c0_i32, %c0_i32_0 : i32, i32
  }
  func.func @transform_1(%arg0: i32) -> (i32, i32) {
    %c0_i32 = arith.constant 0 : i32
    %c0_i32_0 = arith.constant 0 : i32
    return %arg0, %c0_i32 : i32, i32
  }
  func.func @transform_2(%arg0: i32) -> (i32, i32) {
    %c0_i32 = arith.constant 0 : i32
    %c0_i32_0 = arith.constant 0 : i32
    return %arg0, %c0_i32 : i32, i32
  }
  func.func @transform_3(%arg0: i32) -> (i32, i32) {
    %c0_i32 = arith.constant 0 : i32
    %c0_i32_0 = arith.constant 0 : i32
    return %arg0, %c0_i32 : i32, i32
  }
}

</mosaic_0001>

<llo_original>
// kernel: model_end_forward.1
$region0: #{model_end_forward.1}
  #allocation0 [shape = 'u32[]', space=smem, size = 0x4, offset = 0x4, fixed_abs, tag = 'smem constant byte address 0x4 - core index']
  #allocation1 [shape = 'u32[144,128]{1,0:T(1,128)}', space=vmem, size = 0x12000, scoped, tag = 'internal scratch']
  %s0 = inlined_call_operand.vmem [shape: f32[16,64], index: 0, kind: input, shape index: {}]
  %s1 = inlined_call_operand.vmem [shape: f32[128,16], index: 1, kind: input, shape index: {}]
  %s2 = inlined_call_operand.vmem [shape: f32[128,256], index: 2, kind: input, shape index: {}, may-alias: {2,3}]
  %s3 = inlined_call_operand.vmem [shape: f32[128,256], index: 3, kind: output, shape index: {}, may-alias: {2,3}]
  %s4 = sld [smem:[#allocation0]]
  $region22: #{model_end_forward.1} parent=0
    _
  %s6 = ssub.s32 1, %s4
  %s7 = scalar_select 0, %s6, %s4
  // Predicated region
  $region2: #{model_end_forward.1} parent=0 // pred_check
    _
  $region3: #{model_end_forward.1} parent=0 // pred_check_branch
    %9 = sbr.rel (0) target = $region5
  $region4: #{model_end_forward.1} parent=0 // pred_region
    _
  $region5: #{model_end_forward.1} parent=0 // pred_fallthru
    _
  // Predicated region
  $region6: #{model_end_forward.1} parent=0 // pred_check
    _
  $region7: #{model_end_forward.1} parent=0 // pred_check_branch
    %11 = sbr.rel (0) target = $region9
  $region8: #{model_end_forward.1} parent=0 // pred_region
    _
  $region9: #{model_end_forward.1} parent=0 // pred_fallthru
    _
  // Predicated region
  $region10: #{model_end_forward.1} parent=0 // pred_check
    _
  $region11: #{model_end_forward.1} parent=0 // pred_check_branch
    %13 = sbr.rel (0) target = $region13
  $region12: #{model_end_forward.1} parent=0 // pred_region
    _
  $region13: #{model_end_forward.1} parent=0 // pred_fallthru
    _
  %v14 = vld [vmem:[%s1] sm:$0xff]
  %v15 = vld [vmem:[%s1 + $0x8] sm:$0xff]
  %v16 = vld [vmem:[%s1 + $0x10] sm:$0xff]
  %v17 = vld [vmem:[%s1 + $0x18] sm:$0xff]
  %v18 = vld [vmem:[%s1 + $0x20] sm:$0xff]
  %v19 = vld [vmem:[%s1 + $0x28] sm:$0xff]
  %v20 = vld [vmem:[%s1 + $0x30] sm:$0xff]
  %v21 = vld [vmem:[%s1 + $0x38] sm:$0xff]
  %v22 = vld [vmem:[%s1 + $0x40] sm:$0xff]
  %v23 = vld [vmem:[%s1 + $0x48] sm:$0xff]
  %v24 = vld [vmem:[%s1 + $0x50] sm:$0xff]
  %v25 = vld [vmem:[%s1 + $0x58] sm:$0xff]
  %v26 = vld [vmem:[%s1 + $0x60] sm:$0xff]
  %v27 = vld [vmem:[%s1 + $0x68] sm:$0xff]
  %v28 = vld [vmem:[%s1 + $0x70] sm:$0xff]
  %v29 = vld [vmem:[%s1 + $0x78] sm:$0xff]
  %v30 = vld [vmem:[%s0] sm:$0xff]
  %v31 = vld [vmem:[%s0 + $0x8] sm:$0xff]
  %vm32 = vcmask 130048
  %v34 = vsel %vm32, %v14, 0
  %v37 = vsel %vm32, %v15, 0
  %v40 = vsel %vm32, %v16, 0
  %v43 = vsel %vm32, %v17, 0
  %v46 = vsel %vm32, %v18, 0
  %v49 = vsel %vm32, %v19, 0
  %v52 = vsel %vm32, %v20, 0
  %v55 = vsel %vm32, %v21, 0
  %v58 = vsel %vm32, %v22, 0
  %v61 = vsel %vm32, %v23, 0
  %v64 = vsel %vm32, %v24, 0
  %v67 = vsel %vm32, %v25, 0
  %v70 = vsel %vm32, %v26, 0
  %v73 = vsel %vm32, %v27, 0
  %v76 = vsel %vm32, %v28, 0
  %v79 = vsel %vm32, %v29, 0
  %81 = vmatprep.subr.mxu0 0.0
  %v82 = vand.u32 %v30, 4294901760
  %83 = vmatpush1.msra.mxu0 %v82
  %84 = vmatprep.subr.mxu0 0.0
  %v85 = vand.u32 %v31, 4294901760
  %86 = vmatpush1.msra.mxu0 %v85
  %87 = vmatprep.subr.mxu0 0.0
  %88 = vmatpush1.msra.mxu0 0.0
  %89 = vmatprep.subr.mxu0 0.0
  %90 = vmatpush1.msra.mxu0 0.0
  %91 = vmatprep.subr.mxu0 0.0
  %92 = vmatpush1.msra.mxu0 0.0
  %93 = vmatprep.subr.mxu0 0.0
  %94 = vmatpush1.msra.mxu0 0.0
  %95 = vmatprep.subr.mxu0 0.0
  %96 = vmatpush1.msra.mxu0 0.0
  %97 = vmatprep.subr.mxu0 0.0
  %98 = vmatpush1.msra.mxu0 0.0
  %99 = vmatprep.subr.mxu0 0.0
  %100 = vmatpush1.msra.mxu0 0.0
  %101 = vmatprep.subr.mxu0 0.0
  %102 = vmatpush1.msra.mxu0 0.0
  %103 = vmatprep.subr.mxu0 0.0
  %104 = vmatpush1.msra.mxu0 0.0
  %105 = vmatprep.subr.mxu0 0.0
  %106 = vmatpush1.msra.mxu0 0.0
  %107 = vmatprep.subr.mxu0 0.0
  %108 = vmatpush1.msra.mxu0 0.0
  %109 = vmatprep.subr.mxu0 0.0
  %110 = vmatpush1.msra.mxu0 0.0
  %111 = vmatprep.subr.mxu0 0.0
  %112 = vmatpush1.msra.mxu0 0.0
  %113 = vmatprep.subr.mxu0 0.0
  %114 = vmatpush1.msra.mxu0 0.0
  %115 = vmatprep.subr.mxu0 0.0
  %116 = vmatpush1.msra.mxu0 0.0
  %117 = vmatprep.subr.mxu0 0.0
  %118 = vmatpush1.msra.mxu0 0.0
  %119 = vmatprep.subr.mxu0 0.0
  %120 = vmatpush1.msra.mxu0 0.0
  %121 = vmatprep.subr.mxu0 0.0
  %122 = vmatpush1.msra.mxu0 0.0
  %123 = vmatprep.subr.mxu0 0.0
  %124 = vmatpush1.msra.mxu0 0.0
  %125 = vmatprep.subr.mxu0 0.0
  %126 = vmatpush1.msra.mxu0 0.0
  %127 = vmatprep.subr.mxu0 0.0
  %128 = vmatpush1.msra.mxu0 0.0
  %129 = vmatprep.subr.mxu0 0.0
  %130 = vmatpush1.msra.mxu0 0.0
  %131 = vmatprep.subr.mxu0 0.0
  %132 = vmatpush1.msra.mxu0 0.0
  %133 = vmatprep.subr.mxu0 0.0
  %134 = vmatpush1.msra.mxu0 0.0
  %135 = vmatprep.subr.mxu0 0.0
  %136 = vmatpush1.msra.mxu0 0.0
  %137 = vmatprep.subr.mxu0 0.0
  %138 = vmatpush1.msra.mxu0 0.0
  %139 = vmatprep.subr.mxu0 0.0
  %140 = vmatpush1.msra.mxu0 0.0
  %141 = vmatprep.subr.mxu0 0.0
  %142 = vmatpush1.msra.mxu0 0.0
  %143 = vmatprep.subr.mxu0 0.0
  %144 = vmatpush1.msra.mxu0 0.0
  %145 = vmatprep.subr.mxu0 0.0
  %146 = vmatpush1.msra.mxu0 0.0
  %147 = vmatprep.mubr.f32.mxu0 0.0
  %v148 = vand.u32 %v34, 4294901760
  %v149 = vsub.f32 %v34, %v148
  %v150 = vand.u32 %v149, 4294901760
  %v151 = vsub.f32 %v149, %v150
  %v152 = vand.u32 %v151, 4294901760
  %153 = vmatmul.mubr.f32.gmra.mrb[0].mxu0 %v152
  %v154 = vpop.f32.mrb[0].mxu0
  %v155 = vadd.f32 0.0, %v154
  %v156 = vpop.f32.mrb[0].mxu0
  %157 = vmatprep.mubr.f32.mxu0 0.0
  %v158 = vand.u32 %v37, 4294901760
  %v159 = vsub.f32 %v37, %v158
  %v160 = vand.u32 %v159, 4294901760
  %v161 = vsub.f32 %v159, %v160
  %v162 = vand.u32 %v161, 4294901760
  %163 = vmatmul.mubr.f32.gmra.mrb[0].mxu0 %v162
  %v164 = vpop.f32.mrb[0].mxu0
  %v165 = vadd.f32 0.0, %v164
  %v166 = vpop.f32.mrb[0].mxu0
  %167 = vmatprep.mubr.f32.mxu0 0.0
  %v168 = vand.u32 %v40, 4294901760
  %v169 = vsub.f32 %v40, %v168
  %v170 = vand.u32 %v169, 4294901760
  %v171 = vsub.f32 %v169, %v170
  %v172 = vand.u32 %v171, 4294901760
  %173 = vmatmul.mubr.f32.gmra.mrb[0].mxu0 %v172
  %v174 = vpop.f32.mrb[0].mxu0
  %v175 = vadd.f32 0.0, %v174
  %v176 = vpop.f32.mrb[0].mxu0
  %177 = vmatprep.mubr.f32.mxu0 0.0
  %v178 = vand.u32 %v43, 4294901760
  %v179 = vsub.f32 %v43, %v178
  %v180 = vand.u32 %v179, 4294901760
  %v181 = vsub.f32 %v179, %v180
  %v182 = vand.u32 %v181, 4294901760
  %183 = vmatmul.mubr.f32.gmra.mrb[0].mxu0 %v182
  %v184 = vpop.f32.mrb[0].mxu0
  %v185 = vadd.f32 0.0, %v184
  %v186 = vpop.f32.mrb[0].mxu0
  %187 = vmatprep.mubr.f32.mxu0 0.0
  %v188 = vand.u32 %v46, 4294901760
  %v189 = vsub.f32 %v46, %v188
  %v190 = vand.u32 %v189, 4294901760
  %v191 = vsub.f32 %v189, %v190
  %v192 = vand.u32 %v191, 4294901760
  %193 = vmatmul.mubr.f32.gmra.mrb[0].mxu0 %v192
  %v194 = vpop.f32.mrb[0].mxu0
  %v195 = vadd.f32 0.0, %v194
  %v196 = vpop.f32.mrb[0].mxu0
  %197 = vmatprep.mubr.f32.mxu0 0.0
  %v198 = vand.u32 %v49, 4294901760
  %v199 = vsub.f32 %v49, %v198
  %v200 = vand.u32 %v199, 4294901760
  %v201 = vsub.f32 %v199, %v200
  %v202 = vand.u32 %v201, 4294901760
  %203 = vmatmul.mubr.f32.gmra.mrb[0].mxu0 %v202
  %v204 = vpop.f32.mrb[0].mxu0
  %v205 = vadd.f32 0.0, %v204
  %v206 = vpop.f32.mrb[0].mxu0
  %207 = vmatprep.mubr.f32.mxu0 0.0
  %v208 = vand.u32 %v52, 4294901760
  %v209 = vsub.f32 %v52, %v208
  %v210 = vand.u32 %v209, 4294901760
  %v211 = vsub.f32 %v209, %v210
  %v212 = vand.u32 %v211, 4294901760
  %213 = vmatmul.mubr.f32.gmra.mrb[0].mxu0 %v212
  %v214 = vpop.f32.mrb[0].mxu0
  %v215 = vadd.f32 0.0, %v214
  %v216 = vpop.f32.mrb[0].mxu0
  %217 = vmatprep.mubr.f32.mxu0 0.0
  %v218 = vand.u32 %v55, 4294901760
  %v219 = vsub.f32 %v55, %v218
  %v220 = vand.u32 %v219, 4294901760
  %v221 = vsub.f32 %v219, %v220
  %v222 = vand.u32 %v221, 4294901760
  %223 = vmatmul.mubr.f32.gmra.mrb[0].mxu0 %v222
  %v224 = vpop.f32.mrb[0].mxu0
  %v225 = vadd.f32 0.0, %v224
  %v226 = vpop.f32.mrb[0].mxu0
  %227 = vmatprep.mubr.f32.mxu0 0.0
  %v228 = vand.u32 %v58, 4294901760
  %v229 = vsub.f32 %v58, %v228
  %v230 = vand.u32 %v229, 4294901760
  %v231 = vsub.f32 %v229, %v230
  %v232 = vand.u32 %v231, 4294901760
  %233 = vmatmul.mubr.f32.gmra.mrb[0].mxu0 %v232
  %v234 = vpop.f32.mrb[0].mxu0
  %v235 = vadd.f32 0.0, %v234
  %v236 = vpop.f32.mrb[0].mxu0
  %237 = vmatprep.mubr.f32.mxu0 0.0
  %v238 = vand.u32 %v61, 4294901760
  %v239 = vsub.f32 %v61, %v238
  %v240 = vand.u32 %v239, 4294901760
  %v241 = vsub.f32 %v239, %v240
  %v242 = vand.u32 %v241, 4294901760
  %243 = vmatmul.mubr.f32.gmra.mrb[0].mxu0 %v242
  %v244 = vpop.f32.mrb[0].mxu0
  %v245 = vadd.f32 0.0, %v244
  %v246 = vpop.f32.mrb[0].mxu0
  %247 = vmatprep.mubr.f32.mxu0 0.0
  %v248 = vand.u32 %v64, 4294901760
  %v249 = vsub.f32 %v64, %v248
  %v250 = vand.u32 %v249, 4294901760
  %v251 = vsub.f32 %v249, %v250
  %v252 = vand.u32 %v251, 4294901760
  %253 = vmatmul.mubr.f32.gmra.mrb[0].mxu0 %v252
  %v254 = vpop.f32.mrb[0].mxu0
  %v255 = vadd.f32 0.0, %v254
  %v256 = vpop.f32.mrb[0].mxu0
  %257 = vmatprep.mubr.f32.mxu0 0.0
  %v258 = vand.u32 %v67, 4294901760
  %v259 = vsub.f32 %v67, %v258
  %v260 = vand.u32 %v259, 4294901760
  %v261 = vsub.f32 %v259, %v260
  %v262 = vand.u32 %v261, 4294901760
  %263 = vmatmul.mubr.f32.gmra.mrb[0].mxu0 %v262
  %v264 = vpop.f32.mrb[0].mxu0
  %v265 = vadd.f32 0.0, %v264
  %v266 = vpop.f32.mrb[0].mxu0
  %267 = vmatprep.mubr.f32.mxu0 0.0
  %v268 = vand.u32 %v70, 4294901760
  %v269 = vsub.f32 %v70, %v268
  %v270 = vand.u32 %v269, 4294901760
  %v271 = vsub.f32 %v269, %v270
  %v272 = vand.u32 %v271, 4294901760
  %273 = vmatmul.mubr.f32.gmra.mrb[0].mxu0 %v272
  %v274 = vpop.f32.mrb[0].mxu0
  %v275 = vadd.f32 0.0, %v274
  %v276 = vpop.f32.mrb[0].mxu0
  %277 = vmatprep.mubr.f32.mxu0 0.0
  %v278 = vand.u32 %v73, 4294901760
  %v279 = vsub.f32 %v73, %v278
  %v280 = vand.u32 %v279, 4294901760
  %v281 = vsub.f32 %v279, %v280
  %v282 = vand.u32 %v281, 4294901760
  %283 = vmatmul.mubr.f32.gmra.mrb[0].mxu0 %v282
  %v284 = vpop.f32.mrb[0].mxu0
  %v285 = vadd.f32 0.0, %v284
  %v286 = vpop.f32.mrb[0].mxu0
  %287 = vmatprep.mubr.f32.mxu0 0.0
  %v288 = vand.u32 %v76, 4294901760
  %v289 = vsub.f32 %v76, %v288
  %v290 = vand.u32 %v289, 4294901760
  %v291 = vsub.f32 %v289, %v290
  %v292 = vand.u32 %v291, 4294901760
  %293 = vmatmul.mubr.f32.gmra.mrb[0].mxu0 %v292
  %v294 = vpop.f32.mrb[0].mxu0
  %v295 = vadd.f32 0.0, %v294
  %v296 = vpop.f32.mrb[0].mxu0
  %297 = vmatprep.mubr.f32.mxu0 0.0
  %v298 = vand.u32 %v79, 4294901760
  %v299 = vsub.f32 %v79, %v298
  %v300 = vand.u32 %v299, 4294901760
  %v301 = vsub.f32 %v299, %v300
  %v302 = vand.u32 %v301, 4294901760
  %303 = vmatmul.mubr.f32.gmra.mrb[0].mxu0 %v302
  %v304 = vpop.f32.mrb[0].mxu0
  %v305 = vadd.f32 0.0, %v304
  %v306 = vpop.f32.mrb[0].mxu0
  %307 = vdwg.mxu0
  %308 = vmatprep.subr.mxu0 0.0
  %v309 = vand.u32 %v30, 4294901760
  %v310 = vsub.f32 %v30, %v309
  %v311 = vand.u32 %v310, 4294901760
  %v312 = vsub.f32 %v310, %v311
  %v313 = vand.u32 %v312, 4294901760
  %314 = vmatpush1.msra.mxu0 %v313
  %315 = vmatprep.subr.mxu0 0.0
  %v316 = vand.u32 %v31, 4294901760
  %v317 = vsub.f32 %v31, %v316
  %v318 = vand.u32 %v317, 4294901760
  %v319 = vsub.f32 %v317, %v318
  %v320 = vand.u32 %v319, 4294901760
  %321 = vmatpush1.msra.mxu0 %v320
  %322 = vmatprep.subr.mxu0 0.0
  %323 = vmatpush1.msra.mxu0 0.0
  %324 = vmatprep.subr.mxu0 0.0
  %325 = vmatpush1.msra.mxu0 0.0
  %326 = vmatprep.subr.mxu0 0.0
  %327 = vmatpush1.msra.mxu0 0.0
  %328 = vmatprep.subr.mxu0 0.0
  %329 = vmatpush1.msra.mxu0 0.0
  %330 = vmatprep.subr.mxu0 0.0
  %331 = vmatpush1.msra.mxu0 0.0
  %332 = vmatprep.subr.mxu0 0.0
  %333 = vmatpush1.msra.mxu0 0.0
  %334 = vmatprep.subr.mxu0 0.0
  %335 = vmatpush1.msra.mxu0 0.0
  %336 = vmatprep.subr.mxu0 0.0
  %337 = vmatpush1.msra.mxu0 0.0
  %338 = vmatprep.subr.mxu0 0.0
  %339 = vmatpush1.msra.mxu0 0.0
  %340 = vmatprep.subr.mxu0 0.0
  %341 = vmatpush1.msra.mxu0 0.0
  %342 = vmatprep.subr.mxu0 0.0
  %343 = vmatpush1.msra.mxu0 0.0
  %344 = vmatprep.subr.mxu0 0.0
  %345 = vmatpush1.msra.mxu0 0.0
  %346 = vmatprep.subr.mxu0 0.0
  %347 = vmatpush1.msra.mxu0 0.0
  %348 = vmatprep.subr.mxu0 0.0
  %349 = vmatpush1.msra.mxu0 0.0
  %350 = vmatprep.subr.mxu0 0.0
  %351 = vmatpush1.msra.mxu0 0.0
  %352 = vmatprep.subr.mxu0 0.0
  %353 = vmatpush1.msra.mxu0 0.0
  %354 = vmatprep.subr.mxu0 0.0
  %355 = vmatpush1.msra.mxu0 0.0
  %356 = vmatprep.subr.mxu0 0.0
  %357 = vmatpush1.msra.mxu0 0.0
  %358 = vmatprep.subr.mxu0 0.0
  %359 = vmatpush1.msra.mxu0 0.0
  %360 = vmatprep.subr.mxu0 0.0
  %361 = vmatpush1.msra.mxu0 0.0
  %362 = vmatprep.subr.mxu0 0.0
  %363 = vmatpush1.msra.mxu0 0.0
  %364 = vmatprep.subr.mxu0 0.0
  %365 = vmatpush1.msra.mxu0 0.0
  %366 = vmatprep.subr.mxu0 0.0
  %367 = vmatpush1.msra.mxu0 0.0
  %368 = vmatprep.subr.mxu0 0.0
  %369 = vmatpush1.msra.mxu0 0.0
  %370 = vmatprep.subr.mxu0 0.0
  %371 = vmatpush1.msra.mxu0 0.0
  %372 = vmatprep.subr.mxu0 0.0
  %373 = vmatpush1.msra.mxu0 0.0
  %374 = vmatprep.subr.mxu0 0.0
  %375 = vmatpush1.msra.mxu0 0.0
  %376 = vmatprep.subr.mxu0 0.0
  %377 = vmatpush1.msra.mxu0 0.0
  %378 = vmatprep.subr.mxu0 0.0
  %379 = vmatpush1.msra.mxu0 0.0
  %380 = vmatprep.subr.mxu0 0.0
  %381 = vmatpush1.msra.mxu0 0.0
  %382 = vmatprep.mubr.f32.mxu0 0.0
  %v383 = vand.u32 %v34, 4294901760
  %384 = vmatmul.mubr.f32.gmra.mrb[0].mxu0 %v383
  %v385 = vpop.f32.mrb[0].mxu0
  %v386 = vadd.f32 %v155, %v385
  %v387 = vpop.f32.mrb[0].mxu0
  %388 = vmatprep.mubr.f32.mxu0 0.0
  %v389 = vand.u32 %v37, 4294901760
  %390 = vmatmul.mubr.f32.gmra.mrb[0].mxu0 %v389
  %v391 = vpop.f32.mrb[0].mxu0
  %v392 = vadd.f32 %v165, %v391
  %v393 = vpop.f32.mrb[0].mxu0
  %394 = vmatprep.mubr.f32.mxu0 0.0
  %v395 = vand.u32 %v40, 4294901760
  %396 = vmatmul.mubr.f32.gmra.mrb[0].mxu0 %v395
  %v397 = vpop.f32.mrb[0].mxu0
  %v398 = vadd.f32 %v175, %v397
  %v399 = vpop.f32.mrb[0].mxu0
  %400 = vmatprep.mubr.f32.mxu0 0.0
  %v401 = vand.u32 %v43, 4294901760
  %402 = vmatmul.mubr.f32.gmra.mrb[0].mxu0 %v401
  %v403 = vpop.f32.mrb[0].mxu0
  %v404 = vadd.f32 %v185, %v403
  %v405 = vpop.f32.mrb[0].mxu0
  %406 = vmatprep.mubr.f32.mxu0 0.0
  %v407 = vand.u32 %v46, 4294901760
  %408 = vmatmul.mubr.f32.gmra.mrb[0].mxu0 %v407
  %v409 = vpop.f32.mrb[0].mxu0
  %v410 = vadd.f32 %v195, %v409
  %v411 = vpop.f32.mrb[0].mxu0
  %412 = vmatprep.mubr.f32.mxu0 0.0
  %v413 = vand.u32 %v49, 4294901760
  %414 = vmatmul.mubr.f32.gmra.mrb[0].mxu0 %v413
  %v415 = vpop.f32.mrb[0].mxu0
  %v416 = vadd.f32 %v205, %v415
  %v417 = vpop.f32.mrb[0].mxu0
  %418 = vmatprep.mubr.f32.mxu0 0.0
  %v419 = vand.u32 %v52, 4294901760
  %420 = vmatmul.mubr.f32.gmra.mrb[0].mxu0 %v419
  %v421 = vpop.f32.mrb[0].mxu0
  %v422 = vadd.f32 %v215, %v421
  %v423 = vpop.f32.mrb[0].mxu0
  %424 = vmatprep.mubr.f32.mxu0 0.0
  %v425 = vand.u32 %v55, 4294901760
  %426 = vmatmul.mubr.f32.gmra.mrb[0].mxu0 %v425
  %v427 = vpop.f32.mrb[0].mxu0
  %v428 = vadd.f32 %v225, %v427
  %v429 = vpop.f32.mrb[0].mxu0
  %430 = vmatprep.mubr.f32.mxu0 0.0
  %v431 = vand.u32 %v58, 4294901760
  %432 = vmatmul.mubr.f32.gmra.mrb[0].mxu0 %v431
  %v433 = vpop.f32.mrb[0].mxu0
  %v434 = vadd.f32 %v235, %v433
  %v435 = vpop.f32.mrb[0].mxu0
  %436 = vmatprep.mubr.f32.mxu0 0.0
  %v437 = vand.u32 %v61, 4294901760
  %438 = vmatmul.mubr.f32.gmra.mrb[0].mxu0 %v437
  %v439 = vpop.f32.mrb[0].mxu0
  %v440 = vadd.f32 %v245, %v439
  %v441 = vpop.f32.mrb[0].mxu0
  %442 = vmatprep.mubr.f32.mxu0 0.0
  %v443 = vand.u32 %v64, 4294901760
  %444 = vmatmul.mubr.f32.gmra.mrb[0].mxu0 %v443
  %v445 = vpop.f32.mrb[0].mxu0
  %v446 = vadd.f32 %v255, %v445
  %v447 = vpop.f32.mrb[0].mxu0
  %448 = vmatprep.mubr.f32.mxu0 0.0
  %v449 = vand.u32 %v67, 4294901760
  %450 = vmatmul.mubr.f32.gmra.mrb[0].mxu0 %v449
  %v451 = vpop.f32.mrb[0].mxu0
  %v452 = vadd.f32 %v265, %v451
  %v453 = vpop.f32.mrb[0].mxu0
  %454 = vmatprep.mubr.f32.mxu0 0.0
  %v455 = vand.u32 %v70, 4294901760
  %456 = vmatmul.mubr.f32.gmra.mrb[0].mxu0 %v455
  %v457 = vpop.f32.mrb[0].mxu0
  %v458 = vadd.f32 %v275, %v457
  %v459 = vpop.f32.mrb[0].mxu0
  %460 = vmatprep.mubr.f32.mxu0 0.0
  %v461 = vand.u32 %v73, 4294901760
  %462 = vmatmul.mubr.f32.gmra.mrb[0].mxu0 %v461
  %v463 = vpop.f32.mrb[0].mxu0
  %v464 = vadd.f32 %v285, %v463
  %v465 = vpop.f32.mrb[0].mxu0
  %466 = vmatprep.mubr.f32.mxu0 0.0
  %v467 = vand.u32 %v76, 4294901760
  %468 = vmatmul.mubr.f32.gmra.mrb[0].mxu0 %v467
  %v469 = vpop.f32.mrb[0].mxu0
  %v470 = vadd.f32 %v295, %v469
  %v471 = vpop.f32.mrb[0].mxu0
  %472 = vmatprep.mubr.f32.mxu0 0.0
  %v473 = vand.u32 %v79, 4294901760
  %474 = vmatmul.mubr.f32.gmra.mrb[0].mxu0 %v473
  %v475 = vpop.f32.mrb[0].mxu0
  %v476 = vadd.f32 %v305, %v475
  %v477 = vpop.f32.mrb[0].mxu0
  %478 = vdwg.mxu0
  %479 = vmatprep.subr.mxu0 0.0
  %v480 = vand.u32 %v30, 4294901760
  %v481 = vsub.f32 %v30, %v480
  %482 = vmatpush1.msra.mxu0 %v481
  %483 = vmatprep.subr.mxu0 0.0
  %v484 = vand.u32 %v31, 4294901760
  %v485 = vsub.f32 %v31, %v484
  %486 = vmatpush1.msra.mxu0 %v485
  %487 = vmatprep.subr.mxu0 0.0
  %488 = vmatpush1.msra.mxu0 0.0
  %489 = vmatprep.subr.mxu0 0.0
  %490 = vmatpush1.msra.mxu0 0.0
  %491 = vmatprep.subr.mxu0 0.0
  %492 = vmatpush1.msra.mxu0 0.0
  %493 = vmatprep.subr.mxu0 0.0
  %494 = vmatpush1.msra.mxu0 0.0
  %495 = vmatprep.subr.mxu0 0.0
  %496 = vmatpush1.msra.mxu0 0.0
  %497 = vmatprep.subr.mxu0 0.0
  %498 = vmatpush1.msra.mxu0 0.0
  %499 = vmatprep.subr.mxu0 0.0
  %500 = vmatpush1.msra.mxu0 0.0
  %501 = vmatprep.subr.mxu0 0.0
  %502 = vmatpush1.msra.mxu0 0.0
  %503 = vmatprep.subr.mxu0 0.0
  %504 = vmatpush1.msra.mxu0 0.0
  %505 = vmatprep.subr.mxu0 0.0
  %506 = vmatpush1.msra.mxu0 0.0
  %507 = vmatprep.subr.mxu0 0.0
  %508 = vmatpush1.msra.mxu0 0.0
  %509 = vmatprep.subr.mxu0 0.0
  %510 = vmatpush1.msra.mxu0 0.0
  %511 = vmatprep.subr.mxu0 0.0
  %512 = vmatpush1.msra.mxu0 0.0
  %513 = vmatprep.subr.mxu0 0.0
  %514 = vmatpush1.msra.mxu0 0.0
  %515 = vmatprep.subr.mxu0 0.0
  %516 = vmatpush1.msra.mxu0 0.0
  %517 = vmatprep.subr.mxu0 0.0
  %518 = vmatpush1.msra.mxu0 0.0
  %519 = vmatprep.subr.mxu0 0.0
  %520 = vmatpush1.msra.mxu0 0.0
  %521 = vmatprep.subr.mxu0 0.0
  %522 = vmatpush1.msra.mxu0 0.0
  %523 = vmatprep.subr.mxu0 0.0
  %524 = vmatpush1.msra.mxu0 0.0
  %525 = vmatprep.subr.mxu0 0.0
  %526 = vmatpush1.msra.mxu0 0.0
  %527 = vmatprep.subr.mxu0 0.0
  %528 = vmatpush1.msra.mxu0 0.0
  %529 = vmatprep.subr.mxu0 0.0
  %530 = vmatpush1.msra.mxu0 0.0
  %531 = vmatprep.subr.mxu0 0.0
  %532 = vmatpush1.msra.mxu0 0.0
  %533 = vmatprep.subr.mxu0 0.0
  %534 = vmatpush1.msra.mxu0 0.0
  %535 = vmatprep.subr.mxu0 0.0
  %536 = vmatpush1.msra.mxu0 0.0
  %537 = vmatprep.subr.mxu0 0.0
  %538 = vmatpush1.msra.mxu0 0.0
  %539 = vmatprep.subr.mxu0 0.0
  %540 = vmatpush1.msra.mxu0 0.0
  %541 = vmatprep.subr.mxu0 0.0
  %542 = vmatpush1.msra.mxu0 0.0
  %543 = vmatprep.subr.mxu0 0.0
  %544 = vmatpush1.msra.mxu0 0.0
  %545 = vmatprep.subr.mxu0 0.0
  %546 = vmatpush1.msra.mxu0 0.0
  %547 = vmatprep.mubr.f32.mxu0 0.0
  %v548 = vand.u32 %v34, 4294901760
  %v549 = vsub.f32 %v34, %v548
  %550 = vmatmul.mubr.f32.gmra.mrb[0].mxu0 %v549
  %v551 = vpop.f32.mrb[0].mxu0
  %v552 = vadd.f32 %v386, %v551
  %v553 = vpop.f32.mrb[0].mxu0
  %554 = vmatprep.mubr.f32.mxu0 0.0
  %v555 = vand.u32 %v37, 4294901760
  %v556 = vsub.f32 %v37, %v555
  %557 = vmatmul.mubr.f32.gmra.mrb[0].mxu0 %v556
  %v558 = vpop.f32.mrb[0].mxu0
  %v559 = vadd.f32 %v392, %v558
  %v560 = vpop.f32.mrb[0].mxu0
  %561 = vmatprep.mubr.f32.mxu0 0.0
  %v562 = vand.u32 %v40, 4294901760
  %v563 = vsub.f32 %v40, %v562
  %564 = vmatmul.mubr.f32.gmra.mrb[0].mxu0 %v563
  %v565 = vpop.f32.mrb[0].mxu0
  %v566 = vadd.f32 %v398, %v565
  %v567 = vpop.f32.mrb[0].mxu0
  %568 = vmatprep.mubr.f32.mxu0 0.0
  %v569 = vand.u32 %v43, 4294901760
  %v570 = vsub.f32 %v43, %v569
  %571 = vmatmul.mubr.f32.gmra.mrb[0].mxu0 %v570
  %v572 = vpop.f32.mrb[0].mxu0
  %v573 = vadd.f32 %v404, %v572
  %v574 = vpop.f32.mrb[0].mxu0
  %575 = vmatprep.mubr.f32.mxu0 0.0
  %v576 = vand.u32 %v46, 4294901760
  %v577 = vsub.f32 %v46, %v576
  %578 = vmatmul.mubr.f32.gmra.mrb[0].mxu0 %v577
  %v579 = vpop.f32.mrb[0].mxu0
  %v580 = vadd.f32 %v410, %v579
  %v581 = vpop.f32.mrb[0].mxu0
  %582 = vmatprep.mubr.f32.mxu0 0.0
  %v583 = vand.u32 %v49, 4294901760
  %v584 = vsub.f32 %v49, %v583
  %585 = vmatmul.mubr.f32.gmra.mrb[0].mxu0 %v584
  %v586 = vpop.f32.mrb[0].mxu0
  %v587 = vadd.f32 %v416, %v586
  %v588 = vpop.f32.mrb[0].mxu0
  %589 = vmatprep.mubr.f32.mxu0 0.0
  %v590 = vand.u32 %v52, 4294901760
  %v591 = vsub.f32 %v52, %v590
  %592 = vmatmul.mubr.f32.gmra.mrb[0].mxu0 %v591
  %v593 = vpop.f32.mrb[0].mxu0
  %v594 = vadd.f32 %v422, %v593
  %v595 = vpop.f32.mrb[0].mxu0
  %596 = vmatprep.mubr.f32.mxu0 0.0
  %v597 = vand.u32 %v55, 4294901760
  %v598 = vsub.f32 %v55, %v597
  %599 = vmatmul.mubr.f32.gmra.mrb[0].mxu0 %v598
  %v600 = vpop.f32.mrb[0].mxu0
  %v601 = vadd.f32 %v428, %v600
  %v602 = vpop.f32.mrb[0].mxu0
  %603 = vmatprep.mubr.f32.mxu0 0.0
  %v604 = vand.u32 %v58, 4294901760
  %v605 = vsub.f32 %v58, %v604
  %606 = vmatmul.mubr.f32.gmra.mrb[0].mxu0 %v605
  %v607 = vpop.f32.mrb[0].mxu0
  %v608 = vadd.f32 %v434, %v607
  %v609 = vpop.f32.mrb[0].mxu0
  %610 = vmatprep.mubr.f32.mxu0 0.0
  %v611 = vand.u32 %v61, 4294901760
  %v612 = vsub.f32 %v61, %v611
  %613 = vmatmul.mubr.f32.gmra.mrb[0].mxu0 %v612
  %v614 = vpop.f32.mrb[0].mxu0
  %v615 = vadd.f32 %v440, %v614
  %v616 = vpop.f32.mrb[0].mxu0
  %617 = vmatprep.mubr.f32.mxu0 0.0
  %v618 = vand.u32 %v64, 4294901760
  %v619 = vsub.f32 %v64, %v618
  %620 = vmatmul.mubr.f32.gmra.mrb[0].mxu0 %v619
  %v621 = vpop.f32.mrb[0].mxu0
  %v622 = vadd.f32 %v446, %v621
  %v623 = vpop.f32.mrb[0].mxu0
  %624 = vmatprep.mubr.f32.mxu0 0.0
  %v625 = vand.u32 %v67, 4294901760
  %v626 = vsub.f32 %v67, %v625
  %627 = vmatmul.mubr.f32.gmra.mrb[0].mxu0 %v626
  %v628 = vpop.f32.mrb[0].mxu0
  %v629 = vadd.f32 %v452, %v628
  %v630 = vpop.f32.mrb[0].mxu0
  %631 = vmatprep.mubr.f32.mxu0 0.0
  %v632 = vand.u32 %v70, 4294901760
  %v633 = vsub.f32 %v70, %v632
  %634 = vmatmul.mubr.f32.gmra.mrb[0].mxu0 %v633
  %v635 = vpop.f32.mrb[0].mxu0
  %v636 = vadd.f32 %v458, %v635
  %v637 = vpop.f32.mrb[0].mxu0
  %638 = vmatprep.mubr.f32.mxu0 0.0
  %v639 = vand.u32 %v73, 4294901760
  %v640 = vsub.f32 %v73, %v639
  %641 = vmatmul.mubr.f32.gmra.mrb[0].mxu0 %v640
  %v642 = vpop.f32.mrb[0].mxu0
  %v643 = vadd.f32 %v464, %v642
  %v644 = vpop.f32.mrb[0].mxu0
  %645 = vmatprep.mubr.f32.mxu0 0.0
  %v646 = vand.u32 %v76, 4294901760
  %v647 = vsub.f32 %v76, %v646
  %648 = vmatmul.mubr.f32.gmra.mrb[0].mxu0 %v647
  %v649 = vpop.f32.mrb[0].mxu0
  %v650 = vadd.f32 %v470, %v649
  %v651 = vpop.f32.mrb[0].mxu0
  %652 = vmatprep.mubr.f32.mxu0 0.0
  %v653 = vand.u32 %v79, 4294901760
  %v654 = vsub.f32 %v79, %v653
  %655 = vmatmul.mubr.f32.gmra.mrb[0].mxu0 %v654
  %v656 = vpop.f32.mrb[0].mxu0
  %v657 = vadd.f32 %v476, %v656
  %v658 = vpop.f32.mrb[0].mxu0
  %659 = vdwg.mxu0
  %660 = vmatprep.subr.mxu0 0.0
  %v661 = vand.u32 %v30, 4294901760
  %662 = vmatpush1.msra.mxu0 %v661
  %663 = vmatprep.subr.mxu0 0.0
  %v664 = vand.u32 %v31, 4294901760
  %665 = vmatpush1.msra.mxu0 %v664
  %666 = vmatprep.subr.mxu0 0.0
  %667 = vmatpush1.msra.mxu0 0.0
  %668 = vmatprep.subr.mxu0 0.0
  %669 = vmatpush1.msra.mxu0 0.0
  %670 = vmatprep.subr.mxu0 0.0
  %671 = vmatpush1.msra.mxu0 0.0
  %672 = vmatprep.subr.mxu0 0.0
  %673 = vmatpush1.msra.mxu0 0.0
  %674 = vmatprep.subr.mxu0 0.0
  %675 = vmatpush1.msra.mxu0 0.0
  %676 = vmatprep.subr.mxu0 0.0
  %677 = vmatpush1.msra.mxu0 0.0
  %678 = vmatprep.subr.mxu0 0.0
  %679 = vmatpush1.msra.mxu0 0.0
  %680 = vmatprep.subr.mxu0 0.0
  %681 = vmatpush1.msra.mxu0 0.0
  %682 = vmatprep.subr.mxu0 0.0
  %683 = vmatpush1.msra.mxu0 0.0
  %684 = vmatprep.subr.mxu0 0.0
  %685 = vmatpush1.msra.mxu0 0.0
  %686 = vmatprep.subr.mxu0 0.0
  %687 = vmatpush1.msra.mxu0 0.0
  %688 = vmatprep.subr.mxu0 0.0
  %689 = vmatpush1.msra.mxu0 0.0
  %690 = vmatprep.subr.mxu0 0.0
  %691 = vmatpush1.msra.mxu0 0.0
  %692 = vmatprep.subr.mxu0 0.0
  %693 = vmatpush1.msra.mxu0 0.0
  %694 = vmatprep.subr.mxu0 0.0
  %695 = vmatpush1.msra.mxu0 0.0
  %696 = vmatprep.subr.mxu0 0.0
  %697 = vmatpush1.msra.mxu0 0.0
  %698 = vmatprep.subr.mxu0 0.0
  %699 = vmatpush1.msra.mxu0 0.0
  %700 = vmatprep.subr.mxu0 0.0
  %701 = vmatpush1.msra.mxu0 0.0
  %702 = vmatprep.subr.mxu0 0.0
  %703 = vmatpush1.msra.mxu0 0.0
  %704 = vmatprep.subr.mxu0 0.0
  %705 = vmatpush1.msra.mxu0 0.0
  %706 = vmatprep.subr.mxu0 0.0
  %707 = vmatpush1.msra.mxu0 0.0
  %708 = vmatprep.subr.mxu0 0.0
  %709 = vmatpush1.msra.mxu0 0.0
  %710 = vmatprep.subr.mxu0 0.0
  %711 = vmatpush1.msra.mxu0 0.0
  %712 = vmatprep.subr.mxu0 0.0
  %713 = vmatpush1.msra.mxu0 0.0
  %714 = vmatprep.subr.mxu0 0.0
  %715 = vmatpush1.msra.mxu0 0.0
  %716 = vmatprep.subr.mxu0 0.0
  %717 = vmatpush1.msra.mxu0 0.0
  %718 = vmatprep.subr.mxu0 0.0
  %719 = vmatpush1.msra.mxu0 0.0
  %720 = vmatprep.subr.mxu0 0.0
  %721 = vmatpush1.msra.mxu0 0.0
  %722 = vmatprep.subr.mxu0 0.0
  %723 = vmatpush1.msra.mxu0 0.0
  %724 = vmatprep.subr.mxu0 0.0
  %725 = vmatpush1.msra.mxu0 0.0
  %726 = vmatprep.mubr.f32.mxu0 0.0
  %v727 = vand.u32 %v34, 4294901760
  %v728 = vsub.f32 %v34, %v727
  %v729 = vand.u32 %v728, 4294901760
  %730 = vmatmul.mubr.f32.gmra.mrb[0].mxu0 %v729
  %v731 = vpop.f32.mrb[0].mxu0
  %v732 = vadd.f32 %v552, %v731
  %v733 = vpop.f32.mrb[0].mxu0
  %734 = vmatprep.mubr.f32.mxu0 0.0
  %v735 = vand.u32 %v37, 4294901760
  %v736 = vsub.f32 %v37, %v735
  %v737 = vand.u32 %v736, 4294901760
  %738 = vmatmul.mubr.f32.gmra.mrb[0].mxu0 %v737
  %v739 = vpop.f32.mrb[0].mxu0
  %v740 = vadd.f32 %v559, %v739
  %v741 = vpop.f32.mrb[0].mxu0
  %742 = vmatprep.mubr.f32.mxu0 0.0
  %v743 = vand.u32 %v40, 4294901760
  %v744 = vsub.f32 %v40, %v743
  %v745 = vand.u32 %v744, 4294901760
  %746 = vmatmul.mubr.f32.gmra.mrb[0].mxu0 %v745
  %v747 = vpop.f32.mrb[0].mxu0
  %v748 = vadd.f32 %v566, %v747
  %v749 = vpop.f32.mrb[0].mxu0
  %750 = vmatprep.mubr.f32.mxu0 0.0
  %v751 = vand.u32 %v43, 4294901760
  %v752 = vsub.f32 %v43, %v751
  %v753 = vand.u32 %v752, 4294901760
  %754 = vmatmul.mubr.f32.gmra.mrb[0].mxu0 %v753
  %v755 = vpop.f32.mrb[0].mxu0
  %v756 = vadd.f32 %v573, %v755
  %v757 = vpop.f32.mrb[0].mxu0
  %758 = vmatprep.mubr.f32.mxu0 0.0
  %v759 = vand.u32 %v46, 4294901760
  %v760 = vsub.f32 %v46, %v759
  %v761 = vand.u32 %v760, 4294901760
  %762 = vmatmul.mubr.f32.gmra.mrb[0].mxu0 %v761
  %v763 = vpop.f32.mrb[0].mxu0
  %v764 = vadd.f32 %v580, %v763
  %v765 = vpop.f32.mrb[0].mxu0
  %766 = vmatprep.mubr.f32.mxu0 0.0
  %v767 = vand.u32 %v49, 4294901760
  %v768 = vsub.f32 %v49, %v767
  %v769 = vand.u32 %v768, 4294901760
  %770 = vmatmul.mubr.f32.gmra.mrb[0].mxu0 %v769
  %v771 = vpop.f32.mrb[0].mxu0
  %v772 = vadd.f32 %v587, %v771
  %v773 = vpop.f32.mrb[0].mxu0
  %774 = vmatprep.mubr.f32.mxu0 0.0
  %v775 = vand.u32 %v52, 4294901760
  %v776 = vsub.f32 %v52, %v775
  %v777 = vand.u32 %v776, 4294901760
  %778 = vmatmul.mubr.f32.gmra.mrb[0].mxu0 %v777
  %v779 = vpop.f32.mrb[0].mxu0
  %v780 = vadd.f32 %v594, %v779
  %v781 = vpop.f32.mrb[0].mxu0
  %782 = vmatprep.mubr.f32.mxu0 0.0
  %v783 = vand.u32 %v55, 4294901760
  %v784 = vsub.f32 %v55, %v783
  %v785 = vand.u32 %v784, 4294901760
  %786 = vmatmul.mubr.f32.gmra.mrb[0].mxu0 %v785
  %v787 = vpop.f32.mrb[0].mxu0
  %v788 = vadd.f32 %v601, %v787
  %v789 = vpop.f32.mrb[0].mxu0
  %790 = vmatprep.mubr.f32.mxu0 0.0
  %v791 = vand.u32 %v58, 4294901760
  %v792 = vsub.f32 %v58, %v791
  %v793 = vand.u32 %v792, 4294901760
  %794 = vmatmul.mubr.f32.gmra.mrb[0].mxu0 %v793
  %v795 = vpop.f32.mrb[0].mxu0
  %v796 = vadd.f32 %v608, %v795
  %v797 = vpop.f32.mrb[0].mxu0
  %798 = vmatprep.mubr.f32.mxu0 0.0
  %v799 = vand.u32 %v61, 4294901760
  %v800 = vsub.f32 %v61, %v799
  %v801 = vand.u32 %v800, 4294901760
  %802 = vmatmul.mubr.f32.gmra.mrb[0].mxu0 %v801
  %v803 = vpop.f32.mrb[0].mxu0
  %v804 = vadd.f32 %v615, %v803
  %v805 = vpop.f32.mrb[0].mxu0
  %806 = vmatprep.mubr.f32.mxu0 0.0
  %v807 = vand.u32 %v64, 4294901760
  %v808 = vsub.f32 %v64, %v807
  %v809 = vand.u32 %v808, 4294901760
  %810 = vmatmul.mubr.f32.gmra.mrb[0].mxu0 %v809
  %v811 = vpop.f32.mrb[0].mxu0
  %v812 = vadd.f32 %v622, %v811
  %v813 = vpop.f32.mrb[0].mxu0
  %814 = vmatprep.mubr.f32.mxu0 0.0
  %v815 = vand.u32 %v67, 4294901760
  %v816 = vsub.f32 %v67, %v815
  %v817 = vand.u32 %v816, 4294901760
  %818 = vmatmul.mubr.f32.gmra.mrb[0].mxu0 %v817
  %v819 = vpop.f32.mrb[0].mxu0
  %v820 = vadd.f32 %v629, %v819
  %v821 = vpop.f32.mrb[0].mxu0
  %822 = vmatprep.mubr.f32.mxu0 0.0
  %v823 = vand.u32 %v70, 4294901760
  %v824 = vsub.f32 %v70, %v823
  %v825 = vand.u32 %v824, 4294901760
  %826 = vmatmul.mubr.f32.gmra.mrb[0].mxu0 %v825
  %v827 = vpop.f32.mrb[0].mxu0
  %v828 = vadd.f32 %v636, %v827
  %v829 = vpop.f32.mrb[0].mxu0
  %830 = vmatprep.mubr.f32.mxu0 0.0
  %v831 = vand.u32 %v73, 4294901760
  %v832 = vsub.f32 %v73, %v831
  %v833 = vand.u32 %v832, 4294901760
  %834 = vmatmul.mubr.f32.gmra.mrb[0].mxu0 %v833
  %v835 = vpop.f32.mrb[0].mxu0
  %v836 = vadd.f32 %v643, %v835
  %v837 = vpop.f32.mrb[0].mxu0
  %838 = vmatprep.mubr.f32.mxu0 0.0
  %v839 = vand.u32 %v76, 4294901760
  %v840 = vsub.f32 %v76, %v839
  %v841 = vand.u32 %v840, 4294901760
  %842 = vmatmul.mubr.f32.gmra.mrb[0].mxu0 %v841
  %v843 = vpop.f32.mrb[0].mxu0
  %v844 = vadd.f32 %v650, %v843
  %v845 = vpop.f32.mrb[0].mxu0
  %846 = vmatprep.mubr.f32.mxu0 0.0
  %v847 = vand.u32 %v79, 4294901760
  %v848 = vsub.f32 %v79, %v847
  %v849 = vand.u32 %v848, 4294901760
  %850 = vmatmul.mubr.f32.gmra.mrb[0].mxu0 %v849
  %v851 = vpop.f32.mrb[0].mxu0
  %v852 = vadd.f32 %v657, %v851
  %v853 = vpop.f32.mrb[0].mxu0
  %854 = vdwg.mxu0
  %855 = vmatprep.subr.mxu0 0.0
  %v856 = vand.u32 %v30, 4294901760
  %v857 = vsub.f32 %v30, %v856
  %v858 = vand.u32 %v857, 4294901760
  %859 = vmatpush1.msra.mxu0 %v858
  %860 = vmatprep.subr.mxu0 0.0
  %v861 = vand.u32 %v31, 4294901760
  %v862 = vsub.f32 %v31, %v861
  %v863 = vand.u32 %v862, 4294901760
  %864 = vmatpush1.msra.mxu0 %v863
  %865 = vmatprep.subr.mxu0 0.0
  %866 = vmatpush1.msra.mxu0 0.0
  %867 = vmatprep.subr.mxu0 0.0
  %868 = vmatpush1.msra.mxu0 0.0
  %869 = vmatprep.subr.mxu0 0.0
  %870 = vmatpush1.msra.mxu0 0.0
  %871 = vmatprep.subr.mxu0 0.0
  %872 = vmatpush1.msra.mxu0 0.0
  %873 = vmatprep.subr.mxu0 0.0
  %874 = vmatpush1.msra.mxu0 0.0
  %875 = vmatprep.subr.mxu0 0.0
  %876 = vmatpush1.msra.mxu0 0.0
  %877 = vmatprep.subr.mxu0 0.0
  %878 = vmatpush1.msra.mxu0 0.0
  %879 = vmatprep.subr.mxu0 0.0
  %880 = vmatpush1.msra.mxu0 0.0
  %881 = vmatprep.subr.mxu0 0.0
  %882 = vmatpush1.msra.mxu0 0.0
  %883 = vmatprep.subr.mxu0 0.0
  %884 = vmatpush1.msra.mxu0 0.0
  %885 = vmatprep.subr.mxu0 0.0
  %886 = vmatpush1.msra.mxu0 0.0
  %887 = vmatprep.subr.mxu0 0.0
  %888 = vmatpush1.msra.mxu0 0.0
  %889 = vmatprep.subr.mxu0 0.0
  %890 = vmatpush1.msra.mxu0 0.0
  %891 = vmatprep.subr.mxu0 0.0
  %892 = vmatpush1.msra.mxu0 0.0
  %893 = vmatprep.subr.mxu0 0.0
  %894 = vmatpush1.msra.mxu0 0.0
  %895 = vmatprep.subr.mxu0 0.0
  %896 = vmatpush1.msra.mxu0 0.0
  %897 = vmatprep.subr.mxu0 0.0
  %898 = vmatpush1.msra.mxu0 0.0
  %899 = vmatprep.subr.mxu0 0.0
  %900 = vmatpush1.msra.mxu0 0.0
  %901 = vmatprep.subr.mxu0 0.0
  %902 = vmatpush1.msra.mxu0 0.0
  %903 = vmatprep.subr.mxu0 0.0
  %904 = vmatpush1.msra.mxu0 0.0
  %905 = vmatprep.subr.mxu0 0.0
  %906 = vmatpush1.msra.mxu0 0.0
  %907 = vmatprep.subr.mxu0 0.0
  %908 = vmatpush1.msra.mxu0 0.0
  %909 = vmatprep.subr.mxu0 0.0
  %910 = vmatpush1.msra.mxu0 0.0
  %911 = vmatprep.subr.mxu0 0.0
  %912 = vmatpush1.msra.mxu0 0.0
  %913 = vmatprep.subr.mxu0 0.0
  %914 = vmatpush1.msra.mxu0 0.0
  %915 = vmatprep.subr.mxu0 0.0
  %916 = vmatpush1.msra.mxu0 0.0
  %917 = vmatprep.subr.mxu0 0.0
  %918 = vmatpush1.msra.mxu0 0.0
  %919 = vmatprep.subr.mxu0 0.0
  %920 = vmatpush1.msra.mxu0 0.0
  %921 = vmatprep.subr.mxu0 0.0
  %922 = vmatpush1.msra.mxu0 0.0
  %923 = vmatprep.subr.mxu0 0.0
  %924 = vmatpush1.msra.mxu0 0.0
  %925 = vmatprep.mubr.f32.mxu0 0.0
  %v926 = vand.u32 %v34, 4294901760
  %927 = vmatmul.mubr.f32.gmra.mrb[0].mxu0 %v926
  %v928 = vpop.f32.mrb[0].mxu0
  %v929 = vadd.f32 %v732, %v928
  %v930 = vpop.f32.mrb[0].mxu0
  %931 = vmatprep.mubr.f32.mxu0 0.0
  %v932 = vand.u32 %v37, 4294901760
  %933 = vmatmul.mubr.f32.gmra.mrb[0].mxu0 %v932
  %v934 = vpop.f32.mrb[0].mxu0
  %v935 = vadd.f32 %v740, %v934
  %v936 = vpop.f32.mrb[0].mxu0
  %937 = vmatprep.mubr.f32.mxu0 0.0
  %v938 = vand.u32 %v40, 4294901760
  %939 = vmatmul.mubr.f32.gmra.mrb[0].mxu0 %v938
  %v940 = vpop.f32.mrb[0].mxu0
  %v941 = vadd.f32 %v748, %v940
  %v942 = vpop.f32.mrb[0].mxu0
  %943 = vmatprep.mubr.f32.mxu0 0.0
  %v944 = vand.u32 %v43, 4294901760
  %945 = vmatmul.mubr.f32.gmra.mrb[0].mxu0 %v944
  %v946 = vpop.f32.mrb[0].mxu0
  %v947 = vadd.f32 %v756, %v946
  %v948 = vpop.f32.mrb[0].mxu0
  %949 = vmatprep.mubr.f32.mxu0 0.0
  %v950 = vand.u32 %v46, 4294901760
  %951 = vmatmul.mubr.f32.gmra.mrb[0].mxu0 %v950
  %v952 = vpop.f32.mrb[0].mxu0
  %v953 = vadd.f32 %v764, %v952
  %v954 = vpop.f32.mrb[0].mxu0
  %955 = vmatprep.mubr.f32.mxu0 0.0
  %v956 = vand.u32 %v49, 4294901760
  %957 = vmatmul.mubr.f32.gmra.mrb[0].mxu0 %v956
  %v958 = vpop.f32.mrb[0].mxu0
  %v959 = vadd.f32 %v772, %v958
  %v960 = vpop.f32.mrb[0].mxu0
  %961 = vmatprep.mubr.f32.mxu0 0.0
  %v962 = vand.u32 %v52, 4294901760
  %963 = vmatmul.mubr.f32.gmra.mrb[0].mxu0 %v962
  %v964 = vpop.f32.mrb[0].mxu0
  %v965 = vadd.f32 %v780, %v964
  %v966 = vpop.f32.mrb[0].mxu0
  %967 = vmatprep.mubr.f32.mxu0 0.0
  %v968 = vand.u32 %v55, 4294901760
  %969 = vmatmul.mubr.f32.gmra.mrb[0].mxu0 %v968
  %v970 = vpop.f32.mrb[0].mxu0
  %v971 = vadd.f32 %v788, %v970
  %v972 = vpop.f32.mrb[0].mxu0
  %973 = vmatprep.mubr.f32.mxu0 0.0
  %v974 = vand.u32 %v58, 4294901760
  %975 = vmatmul.mubr.f32.gmra.mrb[0].mxu0 %v974
  %v976 = vpop.f32.mrb[0].mxu0
  %v977 = vadd.f32 %v796, %v976
  %v978 = vpop.f32.mrb[0].mxu0
  %979 = vmatprep.mubr.f32.mxu0 0.0
  %v980 = vand.u32 %v61, 4294901760
  %981 = vmatmul.mubr.f32.gmra.mrb[0].mxu0 %v980
  %v982 = vpop.f32.mrb[0].mxu0
  %v983 = vadd.f32 %v804, %v982
  %v984 = vpop.f32.mrb[0].mxu0
  %985 = vmatprep.mubr.f32.mxu0 0.0
  %v986 = vand.u32 %v64, 4294901760
  %987 = vmatmul.mubr.f32.gmra.mrb[0].mxu0 %v986
  %v988 = vpop.f32.mrb[0].mxu0
  %v989 = vadd.f32 %v812, %v988
  %v990 = vpop.f32.mrb[0].mxu0
  %991 = vmatprep.mubr.f32.mxu0 0.0
  %v992 = vand.u32 %v67, 4294901760
  %993 = vmatmul.mubr.f32.gmra.mrb[0].mxu0 %v992
  %v994 = vpop.f32.mrb[0].mxu0
  %v995 = vadd.f32 %v820, %v994
  %v996 = vpop.f32.mrb[0].mxu0
  %997 = vmatprep.mubr.f32.mxu0 0.0
  %v998 = vand.u32 %v70, 4294901760
  %999 = vmatmul.mubr.f32.gmra.mrb[0].mxu0 %v998
  %v1000 = vpop.f32.mrb[0].mxu0
  %v1001 = vadd.f32 %v828, %v1000
  %v1002 = vpop.f32.mrb[0].mxu0
  %1003 = vmatprep.mubr.f32.mxu0 0.0
  %v1004 = vand.u32 %v73, 4294901760
  %1005 = vmatmul.mubr.f32.gmra.mrb[0].mxu0 %v1004
  %v1006 = vpop.f32.mrb[0].mxu0
  %v1007 = vadd.f32 %v836, %v1006
  %v1008 = vpop.f32.mrb[0].mxu0
  %1009 = vmatprep.mubr.f32.mxu0 0.0
  %v1010 = vand.u32 %v76, 4294901760
  %1011 = vmatmul.mubr.f32.gmra.mrb[0].mxu0 %v1010
  %v1012 = vpop.f32.mrb[0].mxu0
  %v1013 = vadd.f32 %v844, %v1012
  %v1014 = vpop.f32.mrb[0].mxu0
  %1015 = vmatprep.mubr.f32.mxu0 0.0
  %v1016 = vand.u32 %v79, 4294901760
  %1017 = vmatmul.mubr.f32.gmra.mrb[0].mxu0 %v1016
  %v1018 = vpop.f32.mrb[0].mxu0
  %v1019 = vadd.f32 %v852, %v1018
  %v1020 = vpop.f32.mrb[0].mxu0
  %1021 = vdwg.mxu0
  %1022 = vmatprep.subr.mxu0 0.0
  %v1023 = vand.u32 %v30, 4294901760
  %1024 = vmatpush1.msra.mxu0 %v1023
  %1025 = vmatprep.subr.mxu0 0.0
  %v1026 = vand.u32 %v31, 4294901760
  %1027 = vmatpush1.msra.mxu0 %v1026
  %1028 = vmatprep.subr.mxu0 0.0
  %1029 = vmatpush1.msra.mxu0 0.0
  %1030 = vmatprep.subr.mxu0 0.0
  %1031 = vmatpush1.msra.mxu0 0.0
  %1032 = vmatprep.subr.mxu0 0.0
  %1033 = vmatpush1.msra.mxu0 0.0
  %1034 = vmatprep.subr.mxu0 0.0
  %1035 = vmatpush1.msra.mxu0 0.0
  %1036 = vmatprep.subr.mxu0 0.0
  %1037 = vmatpush1.msra.mxu0 0.0
  %1038 = vmatprep.subr.mxu0 0.0
  %1039 = vmatpush1.msra.mxu0 0.0
  %1040 = vmatprep.subr.mxu0 0.0
  %1041 = vmatpush1.msra.mxu0 0.0
  %1042 = vmatprep.subr.mxu0 0.0
  %1043 = vmatpush1.msra.mxu0 0.0
  %1044 = vmatprep.subr.mxu0 0.0
  %1045 = vmatpush1.msra.mxu0 0.0
  %1046 = vmatprep.subr.mxu0 0.0
  %1047 = vmatpush1.msra.mxu0 0.0
  %1048 = vmatprep.subr.mxu0 0.0
  %1049 = vmatpush1.msra.mxu0 0.0
  %1050 = vmatprep.subr.mxu0 0.0
  %1051 = vmatpush1.msra.mxu0 0.0
  %1052 = vmatprep.subr.mxu0 0.0
  %1053 = vmatpush1.msra.mxu0 0.0
  %1054 = vmatprep.subr.mxu0 0.0
  %1055 = vmatpush1.msra.mxu0 0.0
  %1056 = vmatprep.subr.mxu0 0.0
  %1057 = vmatpush1.msra.mxu0 0.0
  %1058 = vmatprep.subr.mxu0 0.0
  %1059 = vmatpush1.msra.mxu0 0.0
  %1060 = vmatprep.subr.mxu0 0.0
  %1061 = vmatpush1.msra.mxu0 0.0
  %1062 = vmatprep.subr.mxu0 0.0
  %1063 = vmatpush1.msra.mxu0 0.0
  %1064 = vmatprep.subr.mxu0 0.0
  %1065 = vmatpush1.msra.mxu0 0.0
  %1066 = vmatprep.subr.mxu0 0.0
  %1067 = vmatpush1.msra.mxu0 0.0
  %1068 = vmatprep.subr.mxu0 0.0
  %1069 = vmatpush1.msra.mxu0 0.0
  %1070 = vmatprep.subr.mxu0 0.0
  %1071 = vmatpush1.msra.mxu0 0.0
  %1072 = vmatprep.subr.mxu0 0.0
  %1073 = vmatpush1.msra.mxu0 0.0
  %1074 = vmatprep.subr.mxu0 0.0
  %1075 = vmatpush1.msra.mxu0 0.0
  %1076 = vmatprep.subr.mxu0 0.0
  %1077 = vmatpush1.msra.mxu0 0.0
  %1078 = vmatprep.subr.mxu0 0.0
  %1079 = vmatpush1.msra.mxu0 0.0
  %1080 = vmatprep.subr.mxu0 0.0
  %1081 = vmatpush1.msra.mxu0 0.0
  %1082 = vmatprep.subr.mxu0 0.0
  %1083 = vmatpush1.msra.mxu0 0.0
  %1084 = vmatprep.subr.mxu0 0.0
  %1085 = vmatpush1.msra.mxu0 0.0
  %1086 = vmatprep.subr.mxu0 0.0
  %1087 = vmatpush1.msra.mxu0 0.0
  %1088 = vmatprep.mubr.f32.mxu0 0.0
  %v1089 = vand.u32 %v34, 4294901760
  %1090 = vmatmul.mubr.f32.gmra.mrb[0].mxu0 %v1089
  %v1091 = vpop.f32.mrb[0].mxu0
  %v1092 = vadd.f32 %v929, %v1091
  %v1093 = vpop.f32.mrb[0].mxu0
  %1094 = vmatprep.mubr.f32.mxu0 0.0
  %v1095 = vand.u32 %v37, 4294901760
  %1096 = vmatmul.mubr.f32.gmra.mrb[0].mxu0 %v1095
  %v1097 = vpop.f32.mrb[0].mxu0
  %v1098 = vadd.f32 %v935, %v1097
  %v1099 = vpop.f32.mrb[0].mxu0
  %1100 = vmatprep.mubr.f32.mxu0 0.0
  %v1101 = vand.u32 %v40, 4294901760
  %1102 = vmatmul.mubr.f32.gmra.mrb[0].mxu0 %v1101
  %v1103 = vpop.f32.mrb[0].mxu0
  %v1104 = vadd.f32 %v941, %v1103
  %v1105 = vpop.f32.mrb[0].mxu0
  %1106 = vmatprep.mubr.f32.mxu0 0.0
  %v1107 = vand.u32 %v43, 4294901760
  %1108 = vmatmul.mubr.f32.gmra.mrb[0].mxu0 %v1107
  %v1109 = vpop.f32.mrb[0].mxu0
  %v1110 = vadd.f32 %v947, %v1109
  %v1111 = vpop.f32.mrb[0].mxu0
  %1112 = vmatprep.mubr.f32.mxu0 0.0
  %v1113 = vand.u32 %v46, 4294901760
  %1114 = vmatmul.mubr.f32.gmra.mrb[0].mxu0 %v1113
  %v1115 = vpop.f32.mrb[0].mxu0
  %v1116 = vadd.f32 %v953, %v1115
  %v1117 = vpop.f32.mrb[0].mxu0
  %1118 = vmatprep.mubr.f32.mxu0 0.0
  %v1119 = vand.u32 %v49, 4294901760
  %1120 = vmatmul.mubr.f32.gmra.mrb[0].mxu0 %v1119
  %v1121 = vpop.f32.mrb[0].mxu0
  %v1122 = vadd.f32 %v959, %v1121
  %v1123 = vpop.f32.mrb[0].mxu0
  %1124 = vmatprep.mubr.f32.mxu0 0.0
  %v1125 = vand.u32 %v52, 4294901760
  %1126 = vmatmul.mubr.f32.gmra.mrb[0].mxu0 %v1125
  %v1127 = vpop.f32.mrb[0].mxu0
  %v1128 = vadd.f32 %v965, %v1127
  %v1129 = vpop.f32.mrb[0].mxu0
  %1130 = vmatprep.mubr.f32.mxu0 0.0
  %v1131 = vand.u32 %v55, 4294901760
  %1132 = vmatmul.mubr.f32.gmra.mrb[0].mxu0 %v1131
  %v1133 = vpop.f32.mrb[0].mxu0
  %v1134 = vadd.f32 %v971, %v1133
  %v1135 = vpop.f32.mrb[0].mxu0
  %1136 = vmatprep.mubr.f32.mxu0 0.0
  %v1137 = vand.u32 %v58, 4294901760
  %1138 = vmatmul.mubr.f32.gmra.mrb[0].mxu0 %v1137
  %v1139 = vpop.f32.mrb[0].mxu0
  %v1140 = vadd.f32 %v977, %v1139
  %v1141 = vpop.f32.mrb[0].mxu0
  %1142 = vmatprep.mubr.f32.mxu0 0.0
  %v1143 = vand.u32 %v61, 4294901760
  %1144 = vmatmul.mubr.f32.gmra.mrb[0].mxu0 %v1143
  %v1145 = vpop.f32.mrb[0].mxu0
  %v1146 = vadd.f32 %v983, %v1145
  %v1147 = vpop.f32.mrb[0].mxu0
  %1148 = vmatprep.mubr.f32.mxu0 0.0
  %v1149 = vand.u32 %v64, 4294901760
  %1150 = vmatmul.mubr.f32.gmra.mrb[0].mxu0 %v1149
  %v1151 = vpop.f32.mrb[0].mxu0
  %v1152 = vadd.f32 %v989, %v1151
  %v1153 = vpop.f32.mrb[0].mxu0
  %1154 = vmatprep.mubr.f32.mxu0 0.0
  %v1155 = vand.u32 %v67, 4294901760
  %1156 = vmatmul.mubr.f32.gmra.mrb[0].mxu0 %v1155
  %v1157 = vpop.f32.mrb[0].mxu0
  %v1158 = vadd.f32 %v995, %v1157
  %v1159 = vpop.f32.mrb[0].mxu0
  %1160 = vmatprep.mubr.f32.mxu0 0.0
  %v1161 = vand.u32 %v70, 4294901760
  %1162 = vmatmul.mubr.f32.gmra.mrb[0].mxu0 %v1161
  %v1163 = vpop.f32.mrb[0].mxu0
  %v1164 = vadd.f32 %v1001, %v1163
  %v1165 = vpop.f32.mrb[0].mxu0
  %1166 = vmatprep.mubr.f32.mxu0 0.0
  %v1167 = vand.u32 %v73, 4294901760
  %1168 = vmatmul.mubr.f32.gmra.mrb[0].mxu0 %v1167
  %v1169 = vpop.f32.mrb[0].mxu0
  %v1170 = vadd.f32 %v1007, %v1169
  %v1171 = vpop.f32.mrb[0].mxu0
  %1172 = vmatprep.mubr.f32.mxu0 0.0
  %v1173 = vand.u32 %v76, 4294901760
  %1174 = vmatmul.mubr.f32.gmra.mrb[0].mxu0 %v1173
  %v1175 = vpop.f32.mrb[0].mxu0
  %v1176 = vadd.f32 %v1013, %v1175
  %v1177 = vpop.f32.mrb[0].mxu0
  %1178 = vmatprep.mubr.f32.mxu0 0.0
  %v1179 = vand.u32 %v79, 4294901760
  %1180 = vmatmul.mubr.f32.gmra.mrb[0].mxu0 %v1179
  %v1181 = vpop.f32.mrb[0].mxu0
  %v1182 = vadd.f32 %v1019, %v1181
  %v1183 = vpop.f32.mrb[0].mxu0
  %1184 = vdwg.mxu0
  %v1185 = vld [vmem:[%s2] sm:$0xff]
  %v1186 = vld [vmem:[%s2 + $0x10] sm:$0xff]
  %v1187 = vld [vmem:[%s2 + $0x20] sm:$0xff]
  %v1188 = vld [vmem:[%s2 + $0x30] sm:$0xff]
  %v1189 = vld [vmem:[%s2 + $0x40] sm:$0xff]
  %v1190 = vld [vmem:[%s2 + $0x50] sm:$0xff]
  %v1191 = vld [vmem:[%s2 + $0x60] sm:$0xff]
  %v1192 = vld [vmem:[%s2 + $0x70] sm:$0xff]
  %v1193 = vld [vmem:[%s2 + $0x80] sm:$0xff]
  %v1194 = vld [vmem:[%s2 + $0x90] sm:$0xff]
  %v1195 = vld [vmem:[%s2 + $0xa0] sm:$0xff]
  %v1196 = vld [vmem:[%s2 + $0xb0] sm:$0xff]
  %v1197 = vld [vmem:[%s2 + $0xc0] sm:$0xff]
  %v1198 = vld [vmem:[%s2 + $0xd0] sm:$0xff]
  %v1199 = vld [vmem:[%s2 + $0xe0] sm:$0xff]
  %v1200 = vld [vmem:[%s2 + $0xf0] sm:$0xff]
  %v1201 = vadd.f32 %v1185, %v1092
  %v1202 = vadd.f32 %v1186, %v1098
  %v1203 = vadd.f32 %v1187, %v1104
  %v1204 = vadd.f32 %v1188, %v1110
  %v1205 = vadd.f32 %v1189, %v1116
  %v1206 = vadd.f32 %v1190, %v1122
  %v1207 = vadd.f32 %v1191, %v1128
  %v1208 = vadd.f32 %v1192, %v1134
  %v1209 = vadd.f32 %v1193, %v1140
  %v1210 = vadd.f32 %v1194, %v1146
  %v1211 = vadd.f32 %v1195, %v1152
  %v1212 = vadd.f32 %v1196, %v1158
  %v1213 = vadd.f32 %v1197, %v1164
  %v1214 = vadd.f32 %v1198, %v1170
  %v1215 = vadd.f32 %v1199, %v1176
  %v1216 = vadd.f32 %v1200, %v1182
  %vm1217 = vcmask 523264
  %1218 = vst.msk [vmem:[%s3] sm:$0xff] %vm1217, %v1201
  %1219 = vst.msk [vmem:[%s3 + $0x10] sm:$0xff] %vm1217, %v1202
  %1220 = vst.msk [vmem:[%s3 + $0x20] sm:$0xff] %vm1217, %v1203
  %1221 = vst.msk [vmem:[%s3 + $0x30] sm:$0xff] %vm1217, %v1204
  %1222 = vst.msk [vmem:[%s3 + $0x40] sm:$0xff] %vm1217, %v1205
  %1223 = vst.msk [vmem:[%s3 + $0x50] sm:$0xff] %vm1217, %v1206
  %1224 = vst.msk [vmem:[%s3 + $0x60] sm:$0xff] %vm1217, %v1207
  %1225 = vst.msk [vmem:[%s3 + $0x70] sm:$0xff] %vm1217, %v1208
  %1226 = vst.msk [vmem:[%s3 + $0x80] sm:$0xff] %vm1217, %v1209
  %1227 = vst.msk [vmem:[%s3 + $0x90] sm:$0xff] %vm1217, %v1210
  %1228 = vst.msk [vmem:[%s3 + $0xa0] sm:$0xff] %vm1217, %v1211
  %1229 = vst.msk [vmem:[%s3 + $0xb0] sm:$0xff] %vm1217, %v1212
  %1230 = vst.msk [vmem:[%s3 + $0xc0] sm:$0xff] %vm1217, %v1213
  %1231 = vst.msk [vmem:[%s3 + $0xd0] sm:$0xff] %vm1217, %v1214
  %1232 = vst.msk [vmem:[%s3 + $0xe0] sm:$0xff] %vm1217, %v1215
  %1233 = vst.msk [vmem:[%s3 + $0xf0] sm:$0xff] %vm1217, %v1216
  %v1234 = vld [vmem:[%s2] sm:$0xff]
  %v1235 = vld [vmem:[%s2 + $0x10] sm:$0xff]
  %v1236 = vld [vmem:[%s2 + $0x20] sm:$0xff]
  %v1237 = vld [vmem:[%s2 + $0x30] sm:$0xff]
  %v1238 = vld [vmem:[%s2 + $0x40] sm:$0xff]
  %v1239 = vld [vmem:[%s2 + $0x50] sm:$0xff]
  %v1240 = vld [vmem:[%s2 + $0x60] sm:$0xff]
  %v1241 = vld [vmem:[%s2 + $0x70] sm:$0xff]
  %v1242 = vld [vmem:[%s2 + $0x80] sm:$0xff]
  %v1243 = vld [vmem:[%s2 + $0x90] sm:$0xff]
  %v1244 = vld [vmem:[%s2 + $0xa0] sm:$0xff]
  %v1245 = vld [vmem:[%s2 + $0xb0] sm:$0xff]
  %v1246 = vld [vmem:[%s2 + $0xc0] sm:$0xff]
  %v1247 = vld [vmem:[%s2 + $0xd0] sm:$0xff]
  %v1248 = vld [vmem:[%s2 + $0xe0] sm:$0xff]
  %v1249 = vld [vmem:[%s2 + $0xf0] sm:$0xff]
  %1266 = vrot.lane.b32.xlu0 %v1092, 64
  %v1267 = vpop.permute.xlu0 %1266
  %1268 = vrot.lane.b32.xlu0 %v1098, 64
  %v1269 = vpop.permute.xlu0 %1268
  %1270 = vrot.lane.b32.xlu0 %v1104, 64
  %v1271 = vpop.permute.xlu0 %1270
  %1272 = vrot.lane.b32.xlu0 %v1110, 64
  %v1273 = vpop.permute.xlu0 %1272
  %1274 = vrot.lane.b32.xlu0 %v1116, 64
  %v1275 = vpop.permute.xlu0 %1274
  %1276 = vrot.lane.b32.xlu0 %v1122, 64
  %v1277 = vpop.permute.xlu0 %1276
  %1278 = vrot.lane.b32.xlu0 %v1128, 64
  %v1279 = vpop.permute.xlu0 %1278
  %1280 = vrot.lane.b32.xlu0 %v1134, 64
  %v1281 = vpop.permute.xlu0 %1280
  %1282 = vrot.lane.b32.xlu0 %v1140, 64
  %v1283 = vpop.permute.xlu0 %1282
  %1284 = vrot.lane.b32.xlu0 %v1146, 64
  %v1285 = vpop.permute.xlu0 %1284
  %1286 = vrot.lane.b32.xlu0 %v1152, 64
  %v1287 = vpop.permute.xlu0 %1286
  %1288 = vrot.lane.b32.xlu0 %v1158, 64
  %v1289 = vpop.permute.xlu0 %1288
  %1290 = vrot.lane.b32.xlu0 %v1164, 64
  %v1291 = vpop.permute.xlu0 %1290
  %1292 = vrot.lane.b32.xlu0 %v1170, 64
  %v1293 = vpop.permute.xlu0 %1292
  %1294 = vrot.lane.b32.xlu0 %v1176, 64
  %v1295 = vpop.permute.xlu0 %1294
  %1296 = vrot.lane.b32.xlu0 %v1182, 64
  %v1297 = vpop.permute.xlu0 %1296
  %v1314 = vadd.f32 %v1234, %v1267
  %v1315 = vadd.f32 %v1235, %v1269
  %v1316 = vadd.f32 %v1236, %v1271
  %v1317 = vadd.f32 %v1237, %v1273
  %v1318 = vadd.f32 %v1238, %v1275
  %v1319 = vadd.f32 %v1239, %v1277
  %v1320 = vadd.f32 %v1240, %v1279
  %v1321 = vadd.f32 %v1241, %v1281
  %v1322 = vadd.f32 %v1242, %v1283
  %v1323 = vadd.f32 %v1243, %v1285
  %v1324 = vadd.f32 %v1244, %v1287
  %v1325 = vadd.f32 %v1245, %v1289
  %v1326 = vadd.f32 %v1246, %v1291
  %v1327 = vadd.f32 %v1247, %v1293
  %v1328 = vadd.f32 %v1248, %v1295
  %v1329 = vadd.f32 %v1249, %v1297
  %vm1330 = vcmask 1048064
  %1331 = vst.msk [vmem:[%s3] sm:$0xff] %vm1330, %v1314
  %1332 = vst.msk [vmem:[%s3 + $0x10] sm:$0xff] %vm1330, %v1315
  %1333 = vst.msk [vmem:[%s3 + $0x20] sm:$0xff] %vm1330, %v1316
  %1334 = vst.msk [vmem:[%s3 + $0x30] sm:$0xff] %vm1330, %v1317
  %1335 = vst.msk [vmem:[%s3 + $0x40] sm:$0xff] %vm1330, %v1318
  %1336 = vst.msk [vmem:[%s3 + $0x50] sm:$0xff] %vm1330, %v1319
  %1337 = vst.msk [vmem:[%s3 + $0x60] sm:$0xff] %vm1330, %v1320
  %1338 = vst.msk [vmem:[%s3 + $0x70] sm:$0xff] %vm1330, %v1321
  %1339 = vst.msk [vmem:[%s3 + $0x80] sm:$0xff] %vm1330, %v1322
  %1340 = vst.msk [vmem:[%s3 + $0x90] sm:$0xff] %vm1330, %v1323
  %1341 = vst.msk [vmem:[%s3 + $0xa0] sm:$0xff] %vm1330, %v1324
  %1342 = vst.msk [vmem:[%s3 + $0xb0] sm:$0xff] %vm1330, %v1325
  %1343 = vst.msk [vmem:[%s3 + $0xc0] sm:$0xff] %vm1330, %v1326
  %1344 = vst.msk [vmem:[%s3 + $0xd0] sm:$0xff] %vm1330, %v1327
  %1345 = vst.msk [vmem:[%s3 + $0xe0] sm:$0xff] %vm1330, %v1328
  %1346 = vst.msk [vmem:[%s3 + $0xf0] sm:$0xff] %vm1330, %v1329
  %v1347 = vld [vmem:[%s2 + $0x8] sm:$0xff]
  %v1348 = vld [vmem:[%s2 + $0x18] sm:$0xff]
  %v1349 = vld [vmem:[%s2 + $0x28] sm:$0xff]
  %v1350 = vld [vmem:[%s2 + $0x38] sm:$0xff]
  %v1351 = vld [vmem:[%s2 + $0x48] sm:$0xff]
  %v1352 = vld [vmem:[%s2 + $0x58] sm:$0xff]
  %v1353 = vld [vmem:[%s2 + $0x68] sm:$0xff]
  %v1354 = vld [vmem:[%s2 + $0x78] sm:$0xff]
  %v1355 = vld [vmem:[%s2 + $0x88] sm:$0xff]
  %v1356 = vld [vmem:[%s2 + $0x98] sm:$0xff]
  %v1357 = vld [vmem:[%s2 + $0xa8] sm:$0xff]
  %v1358 = vld [vmem:[%s2 + $0xb8] sm:$0xff]
  %v1359 = vld [vmem:[%s2 + $0xc8] sm:$0xff]
  %v1360 = vld [vmem:[%s2 + $0xd8] sm:$0xff]
  %v1361 = vld [vmem:[%s2 + $0xe8] sm:$0xff]
  %v1362 = vld [vmem:[%s2 + $0xf8] sm:$0xff]
  %v1363 = vadd.f32 %v1347, %v1092
  %v1364 = vadd.f32 %v1348, %v1098
  %v1365 = vadd.f32 %v1349, %v1104
  %v1366 = vadd.f32 %v1350, %v1110
  %v1367 = vadd.f32 %v1351, %v1116
  %v1368 = vadd.f32 %v1352, %v1122
  %v1369 = vadd.f32 %v1353, %v1128
  %v1370 = vadd.f32 %v1354, %v1134
  %v1371 = vadd.f32 %v1355, %v1140
  %v1372 = vadd.f32 %v1356, %v1146
  %v1373 = vadd.f32 %v1357, %v1152
  %v1374 = vadd.f32 %v1358, %v1158
  %v1375 = vadd.f32 %v1359, %v1164
  %v1376 = vadd.f32 %v1360, %v1170
  %v1377 = vadd.f32 %v1361, %v1176
  %v1378 = vadd.f32 %v1362, %v1182
  %1379 = vst.msk [vmem:[%s3 + $0x8] sm:$0xff] %vm1217, %v1363
  %1380 = vst.msk [vmem:[%s3 + $0x18] sm:$0xff] %vm1217, %v1364
  %1381 = vst.msk [vmem:[%s3 + $0x28] sm:$0xff] %vm1217, %v1365
  %1382 = vst.msk [vmem:[%s3 + $0x38] sm:$0xff] %vm1217, %v1366
  %1383 = vst.msk [vmem:[%s3 + $0x48] sm:$0xff] %vm1217, %v1367
  %1384 = vst.msk [vmem:[%s3 + $0x58] sm:$0xff] %vm1217, %v1368
  %1385 = vst.msk [vmem:[%s3 + $0x68] sm:$0xff] %vm1217, %v1369
  %1386 = vst.msk [vmem:[%s3 + $0x78] sm:$0xff] %vm1217, %v1370
  %1387 = vst.msk [vmem:[%s3 + $0x88] sm:$0xff] %vm1217, %v1371
  %1388 = vst.msk [vmem:[%s3 + $0x98] sm:$0xff] %vm1217, %v1372
  %1389 = vst.msk [vmem:[%s3 + $0xa8] sm:$0xff] %vm1217, %v1373
  %1390 = vst.msk [vmem:[%s3 + $0xb8] sm:$0xff] %vm1217, %v1374
  %1391 = vst.msk [vmem:[%s3 + $0xc8] sm:$0xff] %vm1217, %v1375
  %1392 = vst.msk [vmem:[%s3 + $0xd8] sm:$0xff] %vm1217, %v1376
  %1393 = vst.msk [vmem:[%s3 + $0xe8] sm:$0xff] %vm1217, %v1377
  %1394 = vst.msk [vmem:[%s3 + $0xf8] sm:$0xff] %vm1217, %v1378
  %v1395 = vld [vmem:[%s2 + $0x8] sm:$0xff]
  %v1396 = vld [vmem:[%s2 + $0x18] sm:$0xff]
  %v1397 = vld [vmem:[%s2 + $0x28] sm:$0xff]
  %v1398 = vld [vmem:[%s2 + $0x38] sm:$0xff]
  %v1399 = vld [vmem:[%s2 + $0x48] sm:$0xff]
  %v1400 = vld [vmem:[%s2 + $0x58] sm:$0xff]
  %v1401 = vld [vmem:[%s2 + $0x68] sm:$0xff]
  %v1402 = vld [vmem:[%s2 + $0x78] sm:$0xff]
  %v1403 = vld [vmem:[%s2 + $0x88] sm:$0xff]
  %v1404 = vld [vmem:[%s2 + $0x98] sm:$0xff]
  %v1405 = vld [vmem:[%s2 + $0xa8] sm:$0xff]
  %v1406 = vld [vmem:[%s2 + $0xb8] sm:$0xff]
  %v1407 = vld [vmem:[%s2 + $0xc8] sm:$0xff]
  %v1408 = vld [vmem:[%s2 + $0xd8] sm:$0xff]
  %v1409 = vld [vmem:[%s2 + $0xe8] sm:$0xff]
  %v1410 = vld [vmem:[%s2 + $0xf8] sm:$0xff]
  %v1411 = vadd.f32 %v1395, %v1267
  %v1412 = vadd.f32 %v1396, %v1269
  %v1413 = vadd.f32 %v1397, %v1271
  %v1414 = vadd.f32 %v1398, %v1273
  %v1415 = vadd.f32 %v1399, %v1275
  %v1416 = vadd.f32 %v1400, %v1277
  %v1417 = vadd.f32 %v1401, %v1279
  %v1418 = vadd.f32 %v1402, %v1281
  %v1419 = vadd.f32 %v1403, %v1283
  %v1420 = vadd.f32 %v1404, %v1285
  %v1421 = vadd.f32 %v1405, %v1287
  %v1422 = vadd.f32 %v1406, %v1289
  %v1423 = vadd.f32 %v1407, %v1291
  %v1424 = vadd.f32 %v1408, %v1293
  %v1425 = vadd.f32 %v1409, %v1295
  %v1426 = vadd.f32 %v1410, %v1297
  %1427 = vst.msk [vmem:[%s3 + $0x8] sm:$0xff] %vm1330, %v1411
  %1428 = vst.msk [vmem:[%s3 + $0x18] sm:$0xff] %vm1330, %v1412
  %1429 = vst.msk [vmem:[%s3 + $0x28] sm:$0xff] %vm1330, %v1413
  %1430 = vst.msk [vmem:[%s3 + $0x38] sm:$0xff] %vm1330, %v1414
  %1431 = vst.msk [vmem:[%s3 + $0x48] sm:$0xff] %vm1330, %v1415
  %1432 = vst.msk [vmem:[%s3 + $0x58] sm:$0xff] %vm1330, %v1416
  %1433 = vst.msk [vmem:[%s3 + $0x68] sm:$0xff] %vm1330, %v1417
  %1434 = vst.msk [vmem:[%s3 + $0x78] sm:$0xff] %vm1330, %v1418
  %1435 = vst.msk [vmem:[%s3 + $0x88] sm:$0xff] %vm1330, %v1419
  %1436 = vst.msk [vmem:[%s3 + $0x98] sm:$0xff] %vm1330, %v1420
  %1437 = vst.msk [vmem:[%s3 + $0xa8] sm:$0xff] %vm1330, %v1421
  %1438 = vst.msk [vmem:[%s3 + $0xb8] sm:$0xff] %vm1330, %v1422
  %1439 = vst.msk [vmem:[%s3 + $0xc8] sm:$0xff] %vm1330, %v1423
  %1440 = vst.msk [vmem:[%s3 + $0xd8] sm:$0xff] %vm1330, %v1424
  %1441 = vst.msk [vmem:[%s3 + $0xe8] sm:$0xff] %vm1330, %v1425
  %1442 = vst.msk [vmem:[%s3 + $0xf8] sm:$0xff] %vm1330, %v1426
  // Predicated region
  $region14: #{model_end_forward.1} parent=0 // pred_check
    _
  $region15: #{model_end_forward.1} parent=0 // pred_check_branch
    %1444 = sbr.rel (0) target = $region17
  $region16: #{model_end_forward.1} parent=0 // pred_region
    _
  $region17: #{model_end_forward.1} parent=0 // pred_fallthru
    _
  // Predicated region
  $region18: #{model_end_forward.1} parent=0 // pred_check
    _
  $region19: #{model_end_forward.1} parent=0 // pred_check_branch
    %1446 = sbr.rel (0) target = $region21
  $region20: #{model_end_forward.1} parent=0 // pred_region
    _
  $region21: #{model_end_forward.1} parent=0 // pred_fallthru
    _

</llo_original>
